<compile_context>
chip_gen: v6e
topology: v6e:2x2x1
jax: 0.10.0
libtpu: 0.0.40
codegen_flags: <defaults>
</compile_context>

<pallas_src>
import jax
import jax.numpy as jnp
from jax import lax
from jax.experimental import pallas as pl
from jax.experimental.pallas import tpu as pltpu

_LANE = 128
_SUBLANE = 8
_NEG = -1e30
_VMEM_LIMIT = 48 * 1024 * 1024


# ----------------------------------------------------------------------------- helpers
def _rup(n, m):
    return ((n + m - 1) // m) * m


def _pad2(x, rows, cols, value=0.0):
    return jnp.pad(x, ((0, rows - x.shape[0]), (0, cols - x.shape[1])),
                   constant_values=value)


# ----------------------------------------------------------------------------- param prep
def prepare_params(p):
    """Pad to lane multiples and fuse per-gate weights into (·, 3H) matrices."""
    Dv, H = p["w_emb"].shape
    V, Dw = p["emb_tab"].shape
    Hp, Vp = _rup(H, _LANE), _rup(V, _LANE)
    Dwp, Dvp = _rup(Dw, _LANE), _rup(Dv, _LANE)

    def cat3(a, b, c, rows):
        return jnp.concatenate(
            [_pad2(a, rows, Hp), _pad2(b, rows, Hp), _pad2(c, rows, Hp)], axis=1)

    # ---- encoder: fold Linear(vid->H) into the fused GRU input-gate matmul.
    w_i3 = cat3(p["enc_w_ir"], p["enc_w_iz"], p["enc_w_in"], Hp)          # (Hp, 3Hp)
    w_emb_p = _pad2(p["w_emb"], Dvp, Hp)
    enc_w_x3 = jnp.dot(w_emb_p, w_i3)                                     # (Dvp, 3Hp)
    enc_b_x3 = (jnp.dot(_pad2(p["b_emb"], 1, Hp), w_i3)
                + cat3(p["enc_b_r"], p["enc_b_z"], p["enc_b_in"], 1))     # (1, 3Hp)
    enc_w_h3 = cat3(p["enc_w_hr"], p["enc_w_hz"], p["enc_w_hn"], Hp)      # (Hp, 3Hp)
    enc_b_hn = _pad2(p["enc_b_hn"], 1, Hp)                                # (1, Hp)

    # ---- decoder: per-gate weights fused along the 3H axis; emb / ctx kept as
    # two separate matmuls (no per-step lane-concat of [emb ; ctx] needed).
    dec_w_e3 = cat3(p["dec_w_er"], p["dec_w_ez"], p["dec_w_en"], Dwp)     # (Dwp, 3Hp)
    dec_w_c3 = cat3(p["dec_w_cr"], p["dec_w_cz"], p["dec_w_cn"], Hp)      # (Hp, 3Hp)
    dec_w_h3 = cat3(p["dec_w_hr"], p["dec_w_hz"], p["dec_w_hn"], Hp)      # (Hp, 3Hp)
    dec_b_x3 = cat3(p["dec_b_r"], p["dec_b_z"], p["dec_b_in"], 1)         # (1, 3Hp)
    dec_b_hn = _pad2(p["dec_b_hn"], 1, Hp)                                # (1, Hp)

    emb_tab_p = jnp.pad(p["emb_tab"], ((0, 0), (0, Dwp - Dw)))            # (V, Dwp)
    w_out_p = _pad2(p["w_out"], Hp, Vp)                                   # (Hp, Vp)
    b_out_p = jnp.pad(p["b_out"], ((0, 0), (0, Vp - V)),
                      constant_values=_NEG)                               # (1, Vp)

    return dict(H=H, V=V, Dw=Dw, Dv=Dv, Hp=Hp, Vp=Vp, Dwp=Dwp, Dvp=Dvp,
                enc_w_x3=enc_w_x3, enc_w_h3=enc_w_h3,
                enc_b_x3=enc_b_x3, enc_b_hn=enc_b_hn,
                dec_w_e3=dec_w_e3, dec_w_c3=dec_w_c3, dec_w_h3=dec_w_h3,
                dec_b_x3=dec_b_x3, dec_b_hn=dec_b_hn,
                emb_tab_p=emb_tab_p, w_out_p=w_out_p, b_out_p=b_out_p)


# ----------------------------------------------------------------------------- encoder
def _encoder_kernel(vid_ref, w_x3_ref, w_h3_ref, b_x3_ref, b_hn_ref,
                    enc_ref, h_sc):
    t = pl.program_id(0)
    hp = h_sc.shape[-1]

    @pl.when(t == 0)
    def _():
        h_sc[...] = jnp.zeros_like(h_sc)

    h = h_sc[...]                                                         # (Bp, Hp)
    x = vid_ref[0]                                                        # (Bp, Dvp)
    gx = jnp.dot(x, w_x3_ref[...], preferred_element_type=jnp.float32) + b_x3_ref[...]
    gh = jnp.dot(h, w_h3_ref[...], preferred_element_type=jnp.float32)
    r = jax.nn.sigmoid(gx[:, :hp] + gh[:, :hp])
    z = jax.nn.sigmoid(gx[:, hp:2 * hp] + gh[:, hp:2 * hp])
    n = jnp.tanh(gx[:, 2 * hp:] + r * (gh[:, 2 * hp:] + b_hn_ref[...]))
    h_new = (1.0 - z) * n + z * h
    enc_ref[0] = h_new
    h_sc[...] = h_new


def encoder_forward(vid_feats, prep):
    B, T, Dv = vid_feats.shape
    H, Hp, Dvp = prep["H"], prep["Hp"], prep["Dvp"]
    Bp = _rup(B, _SUBLANE)

    vid_tm = jnp.transpose(vid_feats.astype(jnp.float32), (1, 0, 2))      # (T, B, Dv)
    vid_tm = jnp.pad(vid_tm, ((0, 0), (0, Bp - B), (0, Dvp - Dv)))

    b_x3 = jnp.broadcast_to(prep["enc_b_x3"], (Bp, 3 * Hp))               # hoisted bias bcast
    b_hn = jnp.broadcast_to(prep["enc_b_hn"], (Bp, Hp))

    grid_spec = pltpu.PrefetchScalarGridSpec(
        num_scalar_prefetch=0,
        grid=(T,),
        in_specs=[
            pl.BlockSpec((1, Bp, Dvp), lambda t: (t, 0, 0)),   # per-step video block
            pl.BlockSpec((Dvp, 3 * Hp), lambda t: (0, 0)),     # resident weights
            pl.BlockSpec((Hp, 3 * Hp), lambda t: (0, 0)),
            pl.BlockSpec((Bp, 3 * Hp), lambda t: (0, 0)),
            pl.BlockSpec((Bp, Hp), lambda t: (0, 0)),
        ],
        out_specs=pl.BlockSpec((1, Bp, Hp), lambda t: (t, 0, 0)),  # streamed enc outputs
        scratch_shapes=[pltpu.VMEM((Bp, Hp), jnp.float32)],        # hidden-state carry
    )
    enc_tm = pl.pallas_call(
        _encoder_kernel,
        out_shape=jax.ShapeDtypeStruct((T, Bp, Hp), jnp.float32),
        grid_spec=grid_spec,
        compiler_params=pltpu.CompilerParams(
            dimension_semantics=("arbitrary",),
            vmem_limit_bytes=_VMEM_LIMIT),
    )(vid_tm, prep["enc_w_x3"], prep["enc_w_h3"], b_x3, b_hn)

    enc_out = jnp.transpose(enc_tm, (1, 0, 2))[:B, :, :H]                 # (B, T, H)
    enc_hidden = enc_tm[T - 1, :B, :H]                                    # (B, H) = last h
    return enc_out, enc_hidden


# ----------------------------------------------------------------------------- decoder
def _decoder_kernel(emb_ref, enc_ref, h0_ref,
                    w_e3_ref, w_c3_ref, w_h3_ref, b_x3_ref, b_hn_ref,
                    w_out_ref, b_out_ref,
                    logp_ref, h_sc):
    l = pl.program_id(0)
    hp = h_sc.shape[-1]

    @pl.when(l == 0)
    def _():
        h_sc[...] = h0_ref[...]

    h = h_sc[...]                                                         # (Bp, Hp)
    enc = enc_ref[...]                                                    # (Bp, T, Hp)

    # dot-product attention over encoder outputs: both contractions on the MXU.
    hq = h[:, None, :]                                                    # (Bp, 1, Hp)
    scores = jnp.einsum('bqh,bth->bqt', hq, enc,
                        preferred_element_type=jnp.float32)               # (Bp, 1, T)
    m = jnp.max(scores, axis=-1, keepdims=True)
    e = jnp.exp(scores - m)
    alpha = e / jnp.sum(e, axis=-1, keepdims=True)                        # (Bp, 1, T)
    ctx = jnp.einsum('bqt,bth->bqh', alpha, enc,
                     preferred_element_type=jnp.float32)[:, 0, :]         # (Bp, Hp)

    # fused GRU cell: two input-gate matmuls (emb, ctx) + one recurrent matmul.
    gx = (jnp.dot(emb_ref[0], w_e3_ref[...], preferred_element_type=jnp.float32)
          + jnp.dot(ctx, w_c3_ref[...], preferred_element_type=jnp.float32)
          + b_x3_ref[...])
    gh = jnp.dot(h, w_h3_ref[...], preferred_element_type=jnp.float32)
    r = jax.nn.sigmoid(gx[:, :hp] + gh[:, :hp])
    z = jax.nn.sigmoid(gx[:, hp:2 * hp] + gh[:, hp:2 * hp])
    n = jnp.tanh(gx[:, 2 * hp:] + r * (gh[:, 2 * hp:] + b_hn_ref[...]))
    h_new = (1.0 - z) * n + z * h
    h_sc[...] = h_new

    # vocab projection + log_softmax (padded vocab columns carry a -1e30 bias).
    logits = jnp.dot(h_new, w_out_ref[...],
                     preferred_element_type=jnp.float32) + b_out_ref[...]
    mx = jnp.max(logits, axis=-1, keepdims=True)
    sh = logits - mx
    lse = jnp.log(jnp.sum(jnp.exp(sh), axis=-1, keepdims=True))
    logp_ref[0] = sh - lse


def decoder_forward(encoder_hidden, encoder_outputs, targets, prep,
                    teacher_forcing_ratio=1):
    # TODO(synk): only full teacher forcing (ratio == 1) is implemented; stochastic
    # scheduled sampling would need in-kernel RNG-driven feedback of the argmax.
    assert teacher_forcing_ratio == 1
    B, L = targets.shape
    T = encoder_outputs.shape[1]
    H, V = prep["H"], prep["V"]
    Hp, Vp, Dwp = prep["Hp"], prep["Vp"], prep["Dwp"]
    Bp = _rup(B, _SUBLANE)

    # pre-gathered embeddings: no one-hot blob, no (B,V)x(V,Dw) matmul in-kernel.
    emb = jnp.take(prep["emb_tab_p"], targets, axis=0).astype(jnp.float32)  # (B, L, Dwp)
    emb_tm = jnp.transpose(emb, (1, 0, 2))                                  # (L, B, Dwp)
    emb_tm = jnp.pad(emb_tm, ((0, 0), (0, Bp - B), (0, 0)))

    enc_p = jnp.pad(encoder_outputs.astype(jnp.float32),
                    ((0, Bp - B), (0, 0), (0, Hp - H)))                     # (Bp, T, Hp)
    h0_p = jnp.pad(encoder_hidden.astype(jnp.float32),
                   ((0, Bp - B), (0, Hp - H)))                              # (Bp, Hp)

    b_x3 = jnp.broadcast_to(prep["dec_b_x3"], (Bp, 3 * Hp))
    b_hn = jnp.broadcast_to(prep["dec_b_hn"], (Bp, Hp))
    b_out = jnp.broadcast_to(prep["b_out_p"], (Bp, Vp))

    grid_spec = pltpu.PrefetchScalarGridSpec(
        num_scalar_prefetch=0,
        grid=(L,),
        in_specs=[
            pl.BlockSpec((1, Bp, Dwp), lambda l: (l, 0, 0)),   # per-step embedding block
            pl.BlockSpec((Bp, T, Hp), lambda l: (0, 0, 0)),    # resident encoder outputs
            pl.BlockSpec((Bp, Hp), lambda l: (0, 0)),          # initial hidden
            pl.BlockSpec((Dwp, 3 * Hp), lambda l: (0, 0)),     # resident weights
            pl.BlockSpec((Hp, 3 * Hp), lambda l: (0, 0)),
            pl.BlockSpec((Hp, 3 * Hp), lambda l: (0, 0)),
            pl.BlockSpec((Bp, 3 * Hp), lambda l: (0, 0)),
            pl.BlockSpec((Bp, Hp), lambda l: (0, 0)),
            pl.BlockSpec((Hp, Vp), lambda l: (0, 0)),
            pl.BlockSpec((Bp, Vp), lambda l: (0, 0)),
        ],
        out_specs=pl.BlockSpec((1, Bp, Vp), lambda l: (l, 0, 0)),
        scratch_shapes=[pltpu.VMEM((Bp, Hp), jnp.float32)],    # hidden-state carry
    )
    logp_tm = pl.pallas_call(
        _decoder_kernel,
        out_shape=jax.ShapeDtypeStruct((L, Bp, Vp), jnp.float32),
        grid_spec=grid_spec,
        compiler_params=pltpu.CompilerParams(
            dimension_semantics=("arbitrary",),
            vmem_limit_bytes=_VMEM_LIMIT),
    )(emb_tm, enc_p, h0_p,
      prep["dec_w_e3"], prep["dec_w_c3"], prep["dec_w_h3"], b_x3, b_hn,
      prep["w_out_p"], b_out)

    seq_prob = jnp.transpose(logp_tm, (1, 0, 2))[:B, :, :V]               # (B, L, V) log-probs
    seq_preds = jnp.argmax(seq_prob, axis=-1).astype(jnp.int32)           # (B, L)
    return seq_prob, seq_preds


# ----------------------------------------------------------------------------- "Model"
class Model:
    def __init__(self, params):
        self.params = params
        self.prep = prepare_params(params)

    def forward(self, vid_feats, target_variable=None, teacher_forcing_ratio=1):
        encoder_outputs, encoder_hidden = encoder_forward(vid_feats, self.prep)
        seq_prob, seq_preds = decoder_forward(
            encoder_hidden=encoder_hidden, encoder_outputs=encoder_outputs,
            targets=target_variable, prep=self.prep,
            teacher_forcing_ratio=teacher_forcing_ratio)
        return seq_prob, seq_preds

    __call__ = forward


# ----------------------------------------------------------------------------- params
def init_params(key, dv, h, v, dw):
    names = ["w_emb",
             "enc_w_ir", "enc_w_iz", "enc_w_in", "enc_w_hr", "enc_w_hz", "enc_w_hn",
             "emb_tab",
             "dec_w_er", "dec_w_ez", "dec_w_en",
             "dec_w_cr", "dec_w_cz", "dec_w_cn",
             "dec_w_hr", "dec_w_hz", "dec_w_hn",
             "w_out"]
    shapes = {"w_emb": (dv, h),
              "enc_w_ir": (h, h), "enc_w_iz": (h, h), "enc_w_in": (h, h),
              "enc_w_hr": (h, h), "enc_w_hz": (h, h), "enc_w_hn": (h, h),
              "emb_tab": (v, dw),
              "dec_w_er": (dw, h), "dec_w_ez": (dw, h), "dec_w_en": (dw, h),
              "dec_w_cr": (h, h), "dec_w_cz": (h, h), "dec_w_cn": (h, h),
              "dec_w_hr": (h, h), "dec_w_hz": (h, h), "dec_w_hn": (h, h),
              "w_out": (h, v)}
    keys = jax.random.split(key, len(names))
    p = {n: 0.1 * jax.random.normal(k, shapes[n], jnp.float32) for n, k in zip(names, keys)}
    for n in ["b_emb", "enc_b_r", "enc_b_z", "enc_b_in", "enc_b_hn",
              "dec_b_r", "dec_b_z", "dec_b_in", "dec_b_hn"]:
        p[n] = jnp.full((1, h), 0.01, jnp.float32)
    p["b_out"] = jnp.full((1, v), 0.01, jnp.float32)
    return p


# ----------------------------------------------------------------------------- pure-JAX reference
def reference_forward(vid_feats, targets, p):
    def gru(x_lin, h, wr, wz, wn, br, bz, bi, bh):
        r = jax.nn.sigmoid(x_lin[0] + h @ wr + br[0])
        z = jax.nn.sigmoid(x_lin[1] + h @ wz + bz[0])
        n = jnp.tanh(x_lin[2] + bi[0] + r * (h @ wn + bh[0]))
        return (1.0 - z) * n + z * h

    def enc_step(h, x):
        x = x @ p["w_emb"] + p["b_emb"][0]
        h = gru((x @ p["enc_w_ir"], x @ p["enc_w_iz"], x @ p["enc_w_in"]), h,
                p["enc_w_hr"], p["enc_w_hz"], p["enc_w_hn"],
                p["enc_b_r"], p["enc_b_z"], p["enc_b_in"], p["enc_b_hn"])
        return h, h

    B, T, _ = vid_feats.shape
    H = p["w_emb"].shape[1]
    V = p["emb_tab"].shape[0]
    h, enc = lax.scan(enc_step, jnp.zeros((B, H), jnp.float32),
                      jnp.transpose(vid_feats, (1, 0, 2)))                # enc: (T, B, H)

    def dec_step(h, tok):
        emb = jax.nn.one_hot(tok, V, dtype=jnp.float32) @ p["emb_tab"]
        scores = jnp.sum(enc * h[None], axis=-1)
        alpha = jax.nn.softmax(scores, axis=0)
        ctx = jnp.sum(alpha[:, :, None] * enc, axis=0)
        h = gru((emb @ p["dec_w_er"] + ctx @ p["dec_w_cr"],
                 emb @ p["dec_w_ez"] + ctx @ p["dec_w_cz"],
                 emb @ p["dec_w_en"] + ctx @ p["dec_w_cn"]), h,
                p["dec_w_hr"], p["dec_w_hz"], p["dec_w_hn"],
                p["dec_b_r"], p["dec_b_z"], p["dec_b_in"], p["dec_b_hn"])
        logits = h @ p["w_out"] + p["b_out"][0]
        lp = jax.nn.log_softmax(logits, axis=-1)
        return h, (lp, jnp.argmax(lp, axis=-1).astype(jnp.int32))

    _, (lp_tm, pred_tm) = lax.scan(dec_step, h, jnp.transpose(targets, (1, 0)))
    return jnp.transpose(lp_tm, (1, 0, 2)), jnp.transpose(pred_tm, (1, 0))


# ----------------------------------------------------------------------------- main
if __name__ == "__main__":
    B, T, DV, H, V, DW, L = 2, 8, 32, 32, 16, 16, 6

    key = jax.random.PRNGKey(0)
    k_vid, k_tgt, k_par = jax.random.split(key, 3)
    vid_feats = jax.random.normal(k_vid, (B, T, DV), jnp.float32)
    target_variable = jax.random.randint(k_tgt, (B, L), 0, V, jnp.int32)
    params = init_params(k_par, DV, H, V, DW)

    model = Model(params)
    seq_prob, seq_preds = model(vid_feats, target_variable, teacher_forcing_ratio=1)
    seq_prob = jax.block_until_ready(seq_prob)
    seq_preds = jax.block_until_ready(seq_preds)

    ref_prob, ref_preds = reference_forward(vid_feats, target_variable, params)
    max_diff = float(jnp.max(jnp.abs(seq_prob - ref_prob)))
    assert seq_prob.shape == (B, L, V) and seq_preds.shape == (B, L)
    assert max_diff < 2e-4, f"log-prob mismatch vs reference: {max_diff}"

    print("KERNEL_OK")
</pallas_src>

<mosaic_0001>
module attributes {stable_mosaic.version = 11 : i64} {
  func.func @_encoder_kernel(%arg0: i32, %arg1: memref<1x8x128xf32, #tpu.memory_space<vmem>>, %arg2: memref<128x384xf32, #tpu.memory_space<vmem>>, %arg3: memref<128x384xf32, #tpu.memory_space<vmem>>, %arg4: memref<8x384xf32, #tpu.memory_space<vmem>>, %arg5: memref<8x128xf32, #tpu.memory_space<vmem>>, %arg6: memref<1x8x128xf32, #tpu.memory_space<vmem>>, %arg7: memref<8x128xf32, #tpu.memory_space<vmem>>) attributes {dimension_semantics = [#tpu.dimension_semantics<arbitrary>], iteration_bounds = array<i64: 8>, scalar_prefetch = 0 : i64, scratch_operands = 1 : i64, tpu.core_type = #tpu.core_type<tc>, window_params = [{transform_indices = @transform_0, window_bounds = array<i64: 1, 8, 128>}, {pipeline_mode = #tpu.pipeline_mode<synchronous>, transform_indices = @transform_1, window_bounds = array<i64: 128, 384>}, {pipeline_mode = #tpu.pipeline_mode<synchronous>, transform_indices = @transform_2, window_bounds = array<i64: 128, 384>}, {pipeline_mode = #tpu.pipeline_mode<synchronous>, transform_indices = @transform_3, window_bounds = array<i64: 8, 384>}, {pipeline_mode = #tpu.pipeline_mode<synchronous>, transform_indices = @transform_4, window_bounds = array<i64: 8, 128>}, {transform_indices = @transform_5, window_bounds = array<i64: 1, 8, 128>}]} {
    %c0_i32 = arith.constant 0 : i32
    %0 = arith.cmpi eq, %arg0, %c0_i32 : i32
    %1 = arith.extui %0 : i1 to i32
    %c0_i32_0 = arith.constant 0 : i32
    %2 = arith.cmpi ne, %1, %c0_i32_0 : i32
    scf.if %2 {
      %cst_22 = arith.constant 0.000000e+00 : f32
      %44 = vector.broadcast %cst_22 : f32 to vector<8x128xf32>
      %c0_23 = arith.constant 0 : index
      %c0_24 = arith.constant 0 : index
      %45 = vector.load %arg7[%c0_23, %c0_24] : memref<8x128xf32, #tpu.memory_space<vmem>>, vector<8x128xf32>
      tpu.vector_store %arg7[%c0_23, %c0_24], %44 {strides = array<i32>} : memref<8x128xf32, #tpu.memory_space<vmem>>, vector<8x128xf32>,
    } else {
    }
    %c0 = arith.constant 0 : index
    %c0_1 = arith.constant 0 : index
    %3 = vector.load %arg7[%c0, %c0_1] : memref<8x128xf32, #tpu.memory_space<vmem>>, vector<8x128xf32>
    %c0_2 = arith.constant 0 : index
    %c0_3 = arith.constant 0 : index
    %c0_4 = arith.constant 0 : index
    %4 = vector.load %arg1[%c0_2, %c0_3, %c0_4] : memref<1x8x128xf32, #tpu.memory_space<vmem>>, vector<1x8x128xf32>
    %5 = vector.shape_cast %4 : vector<1x8x128xf32> to vector<8x128xf32>
    %c0_5 = arith.constant 0 : index
    %c0_6 = arith.constant 0 : index
    %6 = vector.load %arg2[%c0_5, %c0_6] : memref<128x384xf32, #tpu.memory_space<vmem>>, vector<128x384xf32>
    %cst = arith.constant dense<0.000000e+00> : vector<8x384xf32>
    %7 = tpu.matmul %5, %6, %cst {dimension_numbers = #tpu.dot_dimension_numbers<[1], [0], [0], [1], [0, 0, 1, 1], [], []>} : vector<8x128xf32>, vector<128x384xf32>, vector<8x384xf32> -> vector<8x384xf32>
    %c0_7 = arith.constant 0 : index
    %c0_8 = arith.constant 0 : index
    %8 = vector.load %arg4[%c0_7, %c0_8] : memref<8x384xf32, #tpu.memory_space<vmem>>, vector<8x384xf32>
    %9 = arith.addf %7, %8 : vector<8x384xf32>
    %c0_9 = arith.constant 0 : index
    %c0_10 = arith.constant 0 : index
    %10 = vector.load %arg3[%c0_9, %c0_10] : memref<128x384xf32, #tpu.memory_space<vmem>>, vector<128x384xf32>
    %cst_11 = arith.constant dense<0.000000e+00> : vector<8x384xf32>
    %11 = tpu.matmul %3, %10, %cst_11 {dimension_numbers = #tpu.dot_dimension_numbers<[1], [0], [0], [1], [0, 0, 1, 1], [], []>} : vector<8x128xf32>, vector<128x384xf32>, vector<8x384xf32> -> vector<8x384xf32>
    %12 = vector.extract_strided_slice %9 {offsets = [0, 0], sizes = [8, 128], strides = [1, 1]} : vector<8x384xf32> to vector<8x128xf32>
    %13 = vector.extract_strided_slice %11 {offsets = [0, 0], sizes = [8, 128], strides = [1, 1]} : vector<8x384xf32> to vector<8x128xf32>
    %14 = arith.addf %12, %13 : vector<8x128xf32>
    %15 = arith.negf %14 : vector<8x128xf32>
    %16 = math.exp %15 : vector<8x128xf32>
    %cst_12 = arith.constant 1.000000e+00 : f32
    %17 = vector.broadcast %cst_12 : f32 to vector<8x128xf32>
    %18 = arith.addf %17, %16 : vector<8x128xf32>
    %19 = arith.divf %17, %18 : vector<8x128xf32>
    %20 = vector.extract_strided_slice %9 {offsets = [0, 128], sizes = [8, 128], strides = [1, 1]} : vector<8x384xf32> to vector<8x128xf32>
    %21 = vector.extract_strided_slice %11 {offsets = [0, 128], sizes = [8, 128], strides = [1, 1]} : vector<8x384xf32> to vector<8x128xf32>
    %22 = arith.addf %20, %21 : vector<8x128xf32>
    %23 = arith.negf %22 : vector<8x128xf32>
    %24 = math.exp %23 : vector<8x128xf32>
    %cst_13 = arith.constant 1.000000e+00 : f32
    %25 = vector.broadcast %cst_13 : f32 to vector<8x128xf32>
    %26 = arith.addf %25, %24 : vector<8x128xf32>
    %27 = arith.divf %25, %26 : vector<8x128xf32>
    %28 = vector.extract_strided_slice %9 {offsets = [0, 256], sizes = [8, 128], strides = [1, 1]} : vector<8x384xf32> to vector<8x128xf32>
    %29 = vector.extract_strided_slice %11 {offsets = [0, 256], sizes = [8, 128], strides = [1, 1]} : vector<8x384xf32> to vector<8x128xf32>
    %c0_14 = arith.constant 0 : index
    %c0_15 = arith.constant 0 : index
    %30 = vector.load %arg5[%c0_14, %c0_15] : memref<8x128xf32, #tpu.memory_space<vmem>>, vector<8x128xf32>
    %31 = arith.addf %29, %30 : vector<8x128xf32>
    %32 = arith.mulf %19, %31 : vector<8x128xf32>
    %33 = arith.addf %28, %32 : vector<8x128xf32>
    %34 = math.tanh %33 : vector<8x128xf32>
    %cst_16 = arith.constant 1.000000e+00 : f32
    %35 = vector.broadcast %cst_16 : f32 to vector<8x128xf32>
    %36 = arith.subf %35, %27 : vector<8x128xf32>
    %37 = arith.mulf %36, %34 : vector<8x128xf32>
    %38 = arith.mulf %27, %3 : vector<8x128xf32>
    %39 = arith.addf %37, %38 : vector<8x128xf32>
    %c0_17 = arith.constant 0 : index
    %c0_18 = arith.constant 0 : index
    %c0_19 = arith.constant 0 : index
    %40 = vector.load %arg6[%c0_17, %c0_18, %c0_19] : memref<1x8x128xf32, #tpu.memory_space<vmem>>, vector<1x8x128xf32>
    %41 = vector.shape_cast %40 : vector<1x8x128xf32> to vector<8x128xf32>
    %42 = vector.shape_cast %39 : vector<8x128xf32> to vector<1x8x128xf32>
    tpu.vector_store %arg6[%c0_17, %c0_18, %c0_19], %42 {strides = array<i32>} : memref<1x8x128xf32, #tpu.memory_space<vmem>>, vector<1x8x128xf32>,
    %c0_20 = arith.constant 0 : index
    %c0_21 = arith.constant 0 : index
    %43 = vector.load %arg7[%c0_20, %c0_21] : memref<8x128xf32, #tpu.memory_space<vmem>>, vector<8x128xf32>
    tpu.vector_store %arg7[%c0_20, %c0_21], %39 {strides = array<i32>} : memref<8x128xf32, #tpu.memory_space<vmem>>, vector<8x128xf32>,
    return
  }
  func.func @transform_0(%arg0: i32) -> (i32, i32, i32) {
    %c0_i32 = arith.constant 0 : i32
    %c0_i32_0 = arith.constant 0 : i32
    %c0_i32_1 = arith.constant 0 : i32
    return %arg0, %c0_i32, %c0_i32_0 : i32, i32, i32
  }
  func.func @transform_1(%arg0: i32) -> (i32, i32) {
    %c0_i32 = arith.constant 0 : i32
    %c0_i32_0 = arith.constant 0 : i32
    %c0_i32_1 = arith.constant 0 : i32
    return %c0_i32, %c0_i32_0 : i32, i32
  }
  func.func @transform_2(%arg0: i32) -> (i32, i32) {
    %c0_i32 = arith.constant 0 : i32
    %c0_i32_0 = arith.constant 0 : i32
    %c0_i32_1 = arith.constant 0 : i32
    return %c0_i32, %c0_i32_0 : i32, i32
  }
  func.func @transform_3(%arg0: i32) -> (i32, i32) {
    %c0_i32 = arith.constant 0 : i32
    %c0_i32_0 = arith.constant 0 : i32
    %c0_i32_1 = arith.constant 0 : i32
    return %c0_i32, %c0_i32_0 : i32, i32
  }
  func.func @transform_4(%arg0: i32) -> (i32, i32) {
    %c0_i32 = arith.constant 0 : i32
    %c0_i32_0 = arith.constant 0 : i32
    %c0_i32_1 = arith.constant 0 : i32
    return %c0_i32, %c0_i32_0 : i32, i32
  }
  func.func @transform_5(%arg0: i32) -> (i32, i32, i32) {
    %c0_i32 = arith.constant 0 : i32
    %c0_i32_0 = arith.constant 0 : i32
    %c0_i32_1 = arith.constant 0 : i32
    return %arg0, %c0_i32, %c0_i32_0 : i32, i32, i32
  }
}

</mosaic_0001>

<llo_original>
// kernel: tpu_custom_call.1
$region0: #{tpu_custom_call.1}
  #allocation0 [shape = 'u32[]', space=smem, size = 0x4, offset = 0x4, fixed_abs, tag = 'smem constant byte address 0x4 - core index']
  #allocation1 [shape = 'u32[144,128]{1,0:T(1,128)}', space=vmem, size = 0x12000, scoped, tag = 'internal scratch']
  #allocation2 [shape = 'f32[8,128]{1,0:T(8,128)}', space=vmem, size = 0x1000, scoped, tag = 'scratch operand']
  %s0 = inlined_call_operand.hbm [shape: f32[8,8,128], index: 0, kind: input, shape index: {}]
  %s1 = inlined_call_operand.hbm [shape: f32[128,384], index: 1, kind: input, shape index: {}]
  %s2 = inlined_call_operand.hbm [shape: f32[128,384], index: 2, kind: input, shape index: {}]
  %s3 = inlined_call_operand.hbm [shape: f32[8,384], index: 3, kind: input, shape index: {}]
  %s4 = inlined_call_operand.hbm [shape: f32[8,128], index: 4, kind: input, shape index: {}]
  %s5 = inlined_call_operand.hbm [shape: f32[8,8,128], index: 5, kind: output, shape index: {}]
  %s6 = sld [smem:[#allocation0]]
  $region77: #{tpu_custom_call.1} parent=0
    _
  %s8 = ssub.s32 1, %s6
  %s9 = scalar_select 0, %s8, %s6
  $region1: #{tpu_custom_call.1} parent=0
    #allocation3 [shape = 'u8[8192]{0}', space=vmem, size = 0x2000, scoped, tag = 'input window, operand 0']
    #allocation4 [shape = 's32[2]{0}', space=sflag, size = 0x8, scoped, tag = 'scoped memory for tpu_custom_call.1']
    #allocation5 [shape = 's32[2]{0}', space=sflag, size = 0x8, scoped, tag = 'scoped memory for tpu_custom_call.1']
    #allocation6 [shape = 'u8[196608]{0}', space=vmem, size = 0x30000, scoped, tag = 'input window, operand 1, single buffered']
    #allocation7 [shape = 's32[1]{0}', space=sflag, size = 0x4, scoped, tag = 'scoped memory for tpu_custom_call.1']
    #allocation8 [shape = 'u8[196608]{0}', space=vmem, size = 0x30000, scoped, tag = 'input window, operand 2, single buffered']
    #allocation9 [shape = 'u8[12288]{0}', space=vmem, size = 0x3000, scoped, tag = 'input window, operand 3, single buffered']
    #allocation10 [shape = 's32[1]{0}', space=sflag, size = 0x4, scoped, tag = 'scoped memory for tpu_custom_call.1']
    #allocation11 [shape = 'u8[4096]{0}', space=vmem, size = 0x1000, scoped, tag = 'input window, operand 4, single buffered']
    #allocation12 [shape = 'u8[8192]{0}', space=vmem, size = 0x2000, scoped, tag = 'output window, operand 0']
    %10 = vsyncpa [#allocation4], 0
    %s11 = scalar_lea.sflag [#allocation4], 1
    %12 = vsyncpa %s11, 0
    %13 = vsyncpa [#allocation7], 0
    %14 = vsyncpa [#allocation10], 0
    %15 = vsyncpa [#allocation5], 0
    %s16 = scalar_lea.sflag [#allocation5], 1
    %17 = vsyncpa %s16, 0
    loop: start=0, step=1, limit=10
    $region2: #{tpu_custom_call.1} parent=1 // loop_pre_header
      _
    $region3: #{tpu_custom_call.1} parent=1 // loop_header
      %s19 = sphi 0, %s23
      %p20 = scmp.ge.s32.totalorder %s19, 10
      %s29 = sphi 0, %s31
      %s32 = sphi 0, %s29
      %s33 = sphi 0, %s32
      %s49 = sphi 0, %s33
      %s53 = sphi 0, %s53
      %s55 = sphi 0, %s53
      %s56 = sphi 0, %s55
      %s70 = sphi 0, %s56
      %s74 = sphi 0, %s74
      %s76 = sphi 0, %s74
      %s77 = sphi 0, %s76
      %s91 = sphi 0, %s77
      %s95 = sphi 0, %s95
      %s97 = sphi 0, %s95
      %s98 = sphi 0, %s97
      %s112 = sphi 0, %s98
      %s116 = sphi 0, %s116
      %s118 = sphi 0, %s116
      %s119 = sphi 0, %s118
      %s133 = sphi 0, %s119
      %s139 = sphi 0, %s141
      %s142 = sphi 0, %s139
      %s143 = sphi 0, %s142
      %s159 = sphi 0, %s143
    $region4: #{tpu_custom_call.1} parent=1 // loop_header_branch
      %22 = sbr.rel (%p20) target = $region8
    $region5: #{tpu_custom_call.1} parent=1 // loop_body
      %s24 = ssub.s32 %s19, 1
      %s25 = ssub.s32 %s19, 2
      %s26 = sadd.s32 %s19, 1
      %s27 = ssub.s32 %s19, %s26
      %p28 = scmp.eq.s32.totalorder %s27, 0
      %s30 = sadd.s32 %s29, 1
      %s31 = scalar_select %p28, %s29, %s30
      %p34 = pneg %p28
      %p35 = scmp.eq.s32.totalorder %s19, 7
      %p36 = por %p34, %p35
      %p37 = scmp.ne.s32.totalorder %s29, %s32
      %p38 = scmp.eq.s32.totalorder %s19, 0
      %p39 = por %p37, %p38
      %p40 = scmp.ne.s32.totalorder %s29, %s32
      %p41 = scmp.eq.s32.totalorder %s24, 7
      %p42 = por %p40, %p41
      %p43 = scmp.ne.s32.totalorder %s32, %s33
      %p44 = scmp.eq.s32.totalorder %s24, 0
      %p45 = por %p43, %p44
      %p46 = scmp.ne.s32.totalorder %s32, %s33
      %p47 = scmp.eq.s32.totalorder %s25, 7
      %p48 = por %p46, %p47
      %p50 = scmp.ne.s32.totalorder %s33, %s49
      %p51 = scmp.eq.s32.totalorder %s25, 0
      %p52 = por %p50, %p51
      %s54 = sadd.s32 %s53, 1
      %p57 = scmp.eq.s32.totalorder %s19, 7
      %p58 = scmp.ne.s32.totalorder %s53, %s55
      %p59 = scmp.eq.s32.totalorder %s19, 0
      %p60 = por %p58, %p59
      %p61 = scmp.ne.s32.totalorder %s53, %s55
      %p62 = scmp.eq.s32.totalorder %s24, 7
      %p63 = por %p61, %p62
      %p64 = scmp.ne.s32.totalorder %s55, %s56
      %p65 = scmp.eq.s32.totalorder %s24, 0
      %p66 = por %p64, %p65
      %p67 = scmp.ne.s32.totalorder %s55, %s56
      %p68 = scmp.eq.s32.totalorder %s25, 7
      %p69 = por %p67, %p68
      %p71 = scmp.ne.s32.totalorder %s56, %s70
      %p72 = scmp.eq.s32.totalorder %s25, 0
      %p73 = por %p71, %p72
      %s75 = sadd.s32 %s74, 1
      %p78 = scmp.eq.s32.totalorder %s19, 7
      %p79 = scmp.ne.s32.totalorder %s74, %s76
      %p80 = scmp.eq.s32.totalorder %s19, 0
      %p81 = por %p79, %p80
      %p82 = scmp.ne.s32.totalorder %s74, %s76
      %p83 = scmp.eq.s32.totalorder %s24, 7
      %p84 = por %p82, %p83
      %p85 = scmp.ne.s32.totalorder %s76, %s77
      %p86 = scmp.eq.s32.totalorder %s24, 0
      %p87 = por %p85, %p86
      %p88 = scmp.ne.s32.totalorder %s76, %s77
      %p89 = scmp.eq.s32.totalorder %s25, 7
      %p90 = por %p88, %p89
      %p92 = scmp.ne.s32.totalorder %s77, %s91
      %p93 = scmp.eq.s32.totalorder %s25, 0
      %p94 = por %p92, %p93
      %s96 = sadd.s32 %s95, 1
      %p99 = scmp.eq.s32.totalorder %s19, 7
      %p100 = scmp.ne.s32.totalorder %s95, %s97
      %p101 = scmp.eq.s32.totalorder %s19, 0
      %p102 = por %p100, %p101
      %p103 = scmp.ne.s32.totalorder %s95, %s97
      %p104 = scmp.eq.s32.totalorder %s24, 7
      %p105 = por %p103, %p104
      %p106 = scmp.ne.s32.totalorder %s97, %s98
      %p107 = scmp.eq.s32.totalorder %s24, 0
      %p108 = por %p106, %p107
      %p109 = scmp.ne.s32.totalorder %s97, %s98
      %p110 = scmp.eq.s32.totalorder %s25, 7
      %p111 = por %p109, %p110
      %p113 = scmp.ne.s32.totalorder %s98, %s112
      %p114 = scmp.eq.s32.totalorder %s25, 0
      %p115 = por %p113, %p114
      %s117 = sadd.s32 %s116, 1
      %p120 = scmp.eq.s32.totalorder %s19, 7
      %p121 = scmp.ne.s32.totalorder %s116, %s118
      %p122 = scmp.eq.s32.totalorder %s19, 0
      %p123 = por %p121, %p122
      %p124 = scmp.ne.s32.totalorder %s116, %s118
      %p125 = scmp.eq.s32.totalorder %s24, 7
      %p126 = por %p124, %p125
      %p127 = scmp.ne.s32.totalorder %s118, %s119
      %p128 = scmp.eq.s32.totalorder %s24, 0
      %p129 = por %p127, %p128
      %p130 = scmp.ne.s32.totalorder %s118, %s119
      %p131 = scmp.eq.s32.totalorder %s25, 7
      %p132 = por %p130, %p131
      %p134 = scmp.ne.s32.totalorder %s119, %s133
      %p135 = scmp.eq.s32.totalorder %s25, 0
      %p136 = por %p134, %p135
      %s137 = ssub.s32 %s19, %s26
      %p138 = scmp.eq.s32.totalorder %s137, 0
      %s140 = sadd.s32 %s139, 1
      %s141 = scalar_select %p138, %s139, %s140
      %p144 = pneg %p138
      %p145 = scmp.eq.s32.totalorder %s19, 7
      %p146 = por %p144, %p145
      %p147 = scmp.ne.s32.totalorder %s139, %s142
      %p148 = scmp.eq.s32.totalorder %s19, 0
      %p149 = por %p147, %p148
      %p150 = scmp.ne.s32.totalorder %s139, %s142
      %p151 = scmp.eq.s32.totalorder %s24, 7
      %p152 = por %p150, %p151
      %p153 = scmp.ne.s32.totalorder %s142, %s143
      %p154 = scmp.eq.s32.totalorder %s24, 0
      %p155 = por %p153, %p154
      %p156 = scmp.ne.s32.totalorder %s142, %s143
      %p157 = scmp.eq.s32.totalorder %s25, 7
      %p158 = por %p156, %p157
      %p160 = scmp.ne.s32.totalorder %s143, %s159
      %p161 = scmp.eq.s32.totalorder %s25, 0
      %p162 = por %p160, %p161
      %p163 = scmp.le.s32.totalorder 1, %s19
      %p164 = scmp.lt.s32.totalorder %s19, 9
      %p165 = pnand %p163, %p164
      %p166 = pneg %p165
      // Predicated region
      $region9: #{tpu_custom_call.1} parent=5 // pred_check
        _
      $region10: #{tpu_custom_call.1} parent=5 // pred_check_branch
        %168 = sbr.rel (%p165) target = $region12
      $region11: #{tpu_custom_call.1} parent=5 // pred_region
        %s169 = ssub.s32 %s19, 1
        // Predicated region
        $region13: #{tpu_custom_call.1} parent=11 // pred_check
          %p170 = pneg %p66
        $region14: #{tpu_custom_call.1} parent=11 // pred_check_branch
          %172 = sbr.rel (%p170) target = $region16
        $region15: #{tpu_custom_call.1} parent=11 // pred_region
          %s174 = ssub.s32 6144, 6144
          %175 = vsyncadd [#allocation7], %s174
          %s176 = sshll.u32 [#allocation6], 4
          %s177 = int_to_ptr.vmem [resolvable:$true] %s176
          %182 = dma.hbm_to_vmem [thread:$0]  %s1, 6144, %s177, [#allocation7], 384, 384, 24
        $region16: #{tpu_custom_call.1} parent=11 // pred_fallthru
          _
        // Predicated region
        $region17: #{tpu_custom_call.1} parent=11 // pred_check
          %p183 = pneg %p87
        $region18: #{tpu_custom_call.1} parent=11 // pred_check_branch
          %185 = sbr.rel (%p183) target = $region20
        $region19: #{tpu_custom_call.1} parent=11 // pred_region
          %s187 = ssub.s32 6144, 6144
          %188 = vsyncadd [#allocation7], %s187
          %s189 = sshll.u32 [#allocation8], 4
          %s190 = int_to_ptr.vmem [resolvable:$true] %s189
          %195 = dma.hbm_to_vmem [thread:$0]  %s2, 6144, %s190, [#allocation7], 384, 384, 24
        $region20: #{tpu_custom_call.1} parent=11 // pred_fallthru
          _
        // Predicated region
        $region21: #{tpu_custom_call.1} parent=11 // pred_check
          %p196 = pneg %p108
        $region22: #{tpu_custom_call.1} parent=11 // pred_check_branch
          %198 = sbr.rel (%p196) target = $region24
        $region23: #{tpu_custom_call.1} parent=11 // pred_region
          %s200 = ssub.s32 384, 384
          %201 = vsyncadd [#allocation10], %s200
          %s203 = sshll.u32 [#allocation9], 4
          %s204 = int_to_ptr.vmem [resolvable:$true] %s203
          %206 = dma.hbm_to_vmem [thread:$0]  %s3, 384, %s204, [#allocation10]
        $region24: #{tpu_custom_call.1} parent=11 // pred_fallthru
          _
        // Predicated region
        $region25: #{tpu_custom_call.1} parent=11 // pred_check
          %p207 = pneg %p129
        $region26: #{tpu_custom_call.1} parent=11 // pred_check_branch
          %209 = sbr.rel (%p207) target = $region28
        $region27: #{tpu_custom_call.1} parent=11 // pred_region
          %s211 = ssub.s32 128, 128
          %212 = vsyncadd [#allocation10], %s211
          %s214 = sshll.u32 [#allocation11], 4
          %s215 = int_to_ptr.vmem [resolvable:$true] %s214
          %217 = dma.hbm_to_vmem [thread:$0]  %s4, 128, %s215, [#allocation10]
        $region28: #{tpu_custom_call.1} parent=11 // pred_fallthru
          _
      $region12: #{tpu_custom_call.1} parent=5 // pred_fallthru
        _
      %p218 = scmp.lt.s32.totalorder %s19, 8
      // Predicated region
      $region29: #{tpu_custom_call.1} parent=5 // pred_check
        %p219 = pneg %p218
      $region30: #{tpu_custom_call.1} parent=5 // pred_check_branch
        %221 = sbr.rel (%p219) target = $region32
      $region31: #{tpu_custom_call.1} parent=5 // pred_region
        // Predicated region
        $region33: #{tpu_custom_call.1} parent=31 // pred_check
          %p222 = pneg %p39
        $region34: #{tpu_custom_call.1} parent=31 // pred_check_branch
          %224 = sbr.rel (%p222) target = $region36
        $region35: #{tpu_custom_call.1} parent=31 // pred_region
          %s225 = sand.u32 %s29, 1
          %s226 = scalar_lea.sflag [#allocation4], %s225
          %s227 = sand.u32 %s29, 1
          %s228 = smul.addr %s227, 8
          %s229 = scalar_lea.vmem [#allocation3], %s228
          %s231 = ssub.s32 128, 128
          %232 = vsyncadd %s226, %s231
          %s233 = smul.addr %s19, 128
          %s234 = scalar_lea.hbm %s0, %s233
          %s236 = sshll.u32 %s229, 4
          %s237 = int_to_ptr.vmem [resolvable:$true] %s236
          %239 = dma.hbm_to_vmem [thread:$0]  %s234, 128, %s237, %s226
        $region36: #{tpu_custom_call.1} parent=31 // pred_fallthru
          _
      $region32: #{tpu_custom_call.1} parent=5 // pred_fallthru
        _
      %p240 = scmp.le.s32.totalorder 1, %s19
      %p241 = scmp.lt.s32.totalorder %s19, 9
      %p242 = pnand %p240, %p241
      %p243 = pneg %p242
      // Predicated region
      $region37: #{tpu_custom_call.1} parent=5 // pred_check
        _
      $region38: #{tpu_custom_call.1} parent=5 // pred_check_branch
        %245 = sbr.rel (%p242) target = $region40
      $region39: #{tpu_custom_call.1} parent=5 // pred_region
        %s246 = ssub.s32 %s19, 1
        %s247 = sand.u32 %s32, 1
        %s248 = scalar_lea.sflag [#allocation4], %s247
        %s249 = sand.u32 %s32, 1
        %s250 = smul.addr %s249, 8
        %s251 = scalar_lea.vmem [#allocation3], %s250
        // Predicated region
        $region41: #{tpu_custom_call.1} parent=39 // pred_check
          %p252 = pneg %p45
        $region42: #{tpu_custom_call.1} parent=39 // pred_check_branch
          %254 = sbr.rel (%p252) target = $region44
        $region43: #{tpu_custom_call.1} parent=39 // pred_region
          %255 = dma.done %s248, 128
        $region44: #{tpu_custom_call.1} parent=39 // pred_fallthru
          _
        // Predicated region
        $region45: #{tpu_custom_call.1} parent=39 // pred_check
          %p256 = pneg %p66
        $region46: #{tpu_custom_call.1} parent=39 // pred_check_branch
          %258 = sbr.rel (%p256) target = $region48
        $region47: #{tpu_custom_call.1} parent=39 // pred_region
          %259 = dma.done [#allocation7], 6144
        $region48: #{tpu_custom_call.1} parent=39 // pred_fallthru
          _
        // Predicated region
        $region49: #{tpu_custom_call.1} parent=39 // pred_check
          %p260 = pneg %p87
        $region50: #{tpu_custom_call.1} parent=39 // pred_check_branch
          %262 = sbr.rel (%p260) target = $region52
        $region51: #{tpu_custom_call.1} parent=39 // pred_region
          %263 = dma.done [#allocation7], 6144
        $region52: #{tpu_custom_call.1} parent=39 // pred_fallthru
          _
        // Predicated region
        $region53: #{tpu_custom_call.1} parent=39 // pred_check
          %p264 = pneg %p108
        $region54: #{tpu_custom_call.1} parent=39 // pred_check_branch
          %266 = sbr.rel (%p264) target = $region56
        $region55: #{tpu_custom_call.1} parent=39 // pred_region
          %267 = dma.done [#allocation10], 384
        $region56: #{tpu_custom_call.1} parent=39 // pred_fallthru
          _
        // Predicated region
        $region57: #{tpu_custom_call.1} parent=39 // pred_check
          %p268 = pneg %p129
        $region58: #{tpu_custom_call.1} parent=39 // pred_check_branch
          %270 = sbr.rel (%p268) target = $region60
        $region59: #{tpu_custom_call.1} parent=39 // pred_region
          %271 = dma.done [#allocation10], 128
        $region60: #{tpu_custom_call.1} parent=39 // pred_fallthru
          _
        %s272 = sand.u32 %s32, 1
        %s273 = scalar_lea.sflag [#allocation4], %s272
        %s274 = sand.u32 %s32, 1
        %s275 = smul.addr %s274, 8
        %s276 = scalar_lea.vmem [#allocation3], %s275
        %p277 = pneg %p45
        %p278 = pneg %p42
        %p279 = pneg %p66
        %p280 = pneg %p63
        %p281 = pneg %p87
        %p282 = pneg %p84
        %p283 = pneg %p108
        %p284 = pneg %p105
        %p285 = pneg %p129
        %p286 = pneg %p126
        %p287 = pneg %p155
        %p288 = pneg %p152
        %s289 = sand.u32 %s142, 1
        %s290 = scalar_lea.sflag [#allocation5], %s289
        %s291 = sand.u32 %s142, 1
        %s292 = smul.addr %s291, 8
        %s293 = scalar_lea.vmem [#allocation12], %s292
        %p294 = scmp.eq.s32.totalorder %s24, 0
        // Predicated region
        $region61: #{tpu_custom_call.1} parent=39 // pred_check
          %p295 = pneg %p294
        $region62: #{tpu_custom_call.1} parent=39 // pred_check_branch
          %297 = sbr.rel (%p295) target = $region64
        $region63: #{tpu_custom_call.1} parent=39 // pred_region
          %298 = vst [vmem:[#allocation2] sm:$0xff] 0.0
        $region64: #{tpu_custom_call.1} parent=39 // pred_fallthru
          _
        %v299 = vld [vmem:[#allocation2] sm:$0xff]
        %v300 = vld [vmem:[%s251] sm:$0xff]
        %v301 = vld [vmem:[#allocation6] sm:$0xff]
        %v302 = vld [vmem:[#allocation6 + $0x8] sm:$0xff]
        %v303 = vld [vmem:[#allocation6 + $0x10] sm:$0xff]
        %v304 = vld [vmem:[#allocation6 + $0x18] sm:$0xff]
        %v305 = vld [vmem:[#allocation6 + $0x20] sm:$0xff]
        %v306 = vld [vmem:[#allocation6 + $0x28] sm:$0xff]
        %v307 = vld [vmem:[#allocation6 + $0x30] sm:$0xff]
        %v308 = vld [vmem:[#allocation6 + $0x38] sm:$0xff]
        %v309 = vld [vmem:[#allocation6 + $0x40] sm:$0xff]
        %v310 = vld [vmem:[#allocation6 + $0x48] sm:$0xff]
        %v311 = vld [vmem:[#allocation6 + $0x50] sm:$0xff]
        %v312 = vld [vmem:[#allocation6 + $0x58] sm:$0xff]
        %v313 = vld [vmem:[#allocation6 + $0x60] sm:$0xff]
        %v314 = vld [vmem:[#allocation6 + $0x68] sm:$0xff]
        %v315 = vld [vmem:[#allocation6 + $0x70] sm:$0xff]
        %v316 = vld [vmem:[#allocation6 + $0x78] sm:$0xff]
        %v317 = vld [vmem:[#allocation6 + $0x80] sm:$0xff]
        %v318 = vld [vmem:[#allocation6 + $0x88] sm:$0xff]
        %v319 = vld [vmem:[#allocation6 + $0x90] sm:$0xff]
        %v320 = vld [vmem:[#allocation6 + $0x98] sm:$0xff]
        %v321 = vld [vmem:[#allocation6 + $0xa0] sm:$0xff]
        %v322 = vld [vmem:[#allocation6 + $0xa8] sm:$0xff]
        %v323 = vld [vmem:[#allocation6 + $0xb0] sm:$0xff]
        %v324 = vld [vmem:[#allocation6 + $0xb8] sm:$0xff]
        %v325 = vld [vmem:[#allocation6 + $0xc0] sm:$0xff]
        %v326 = vld [vmem:[#allocation6 + $0xc8] sm:$0xff]
        %v327 = vld [vmem:[#allocation6 + $0xd0] sm:$0xff]
        %v328 = vld [vmem:[#allocation6 + $0xd8] sm:$0xff]
        %v329 = vld [vmem:[#allocation6 + $0xe0] sm:$0xff]
        %v330 = vld [vmem:[#allocation6 + $0xe8] sm:$0xff]
        %v331 = vld [vmem:[#allocation6 + $0xf0] sm:$0xff]
        %v332 = vld [vmem:[#allocation6 + $0xf8] sm:$0xff]
        %v333 = vld [vmem:[#allocation6 + $0x100] sm:$0xff]
        %v334 = vld [vmem:[#allocation6 + $0x108] sm:$0xff]
        %v335 = vld [vmem:[#allocation6 + $0x110] sm:$0xff]
        %v336 = vld [vmem:[#allocation6 + $0x118] sm:$0xff]
        %v337 = vld [vmem:[#allocation6 + $0x120] sm:$0xff]
        %v338 = vld [vmem:[#allocation6 + $0x128] sm:$0xff]
        %v339 = vld [vmem:[#allocation6 + $0x130] sm:$0xff]
        %v340 = vld [vmem:[#allocation6 + $0x138] sm:$0xff]
        %v341 = vld [vmem:[#allocation6 + $0x140] sm:$0xff]
        %v342 = vld [vmem:[#allocation6 + $0x148] sm:$0xff]
        %v343 = vld [vmem:[#allocation6 + $0x150] sm:$0xff]
        %v344 = vld [vmem:[#allocation6 + $0x158] sm:$0xff]
        %v345 = vld [vmem:[#allocation6 + $0x160] sm:$0xff]
        %v346 = vld [vmem:[#allocation6 + $0x168] sm:$0xff]
        %v347 = vld [vmem:[#allocation6 + $0x170] sm:$0xff]
        %v348 = vld [vmem:[#allocation6 + $0x178] sm:$0xff]
        %v349 = vld [vmem:[#allocation9] sm:$0xff]
        %v350 = vld [vmem:[#allocation9 + $0x8] sm:$0xff]
        %v351 = vld [vmem:[#allocation9 + $0x10] sm:$0xff]
        %352 = vmatprep.subr.mxu0 %v347
        %353 = vmatpush1.msra.mxu0 %v346
        %354 = vmatprep.subr.mxu0 %v344
        %355 = vmatpush1.msra.mxu0 %v343
        %356 = vmatprep.subr.mxu0 %v341
        %357 = vmatpush1.msra.mxu0 %v340
        %358 = vmatprep.subr.mxu0 %v338
        %359 = vmatpush1.msra.mxu0 %v337
        %360 = vmatprep.subr.mxu0 %v335
        %361 = vmatpush1.msra.mxu0 %v334
        %362 = vmatprep.subr.mxu0 %v332
        %363 = vmatpush1.msra.mxu0 %v331
        %364 = vmatprep.subr.mxu0 %v329
        %365 = vmatpush1.msra.mxu0 %v328
        %366 = vmatprep.subr.mxu0 %v326
        %367 = vmatpush1.msra.mxu0 %v325
        %368 = vmatprep.subr.mxu0 %v323
        %369 = vmatpush1.msra.mxu0 %v322
        %370 = vmatprep.subr.mxu0 %v320
        %371 = vmatpush1.msra.mxu0 %v319
        %372 = vmatprep.subr.mxu0 %v317
        %373 = vmatpush1.msra.mxu0 %v316
        %374 = vmatprep.subr.mxu0 %v314
        %375 = vmatpush1.msra.mxu0 %v313
        %376 = vmatprep.subr.mxu0 %v311
        %377 = vmatpush1.msra.mxu0 %v310
        %378 = vmatprep.subr.mxu0 %v308
        %379 = vmatpush1.msra.mxu0 %v307
        %380 = vmatprep.subr.mxu0 %v305
        %381 = vmatpush1.msra.mxu0 %v304
        %382 = vmatprep.subr.mxu0 %v302
        %383 = vmatpush1.msra.mxu0 %v301
        %384 = vmatprep.subr.mxu0 0.0
        %385 = vmatpush2.msra.mxu0 0.0
        %386 = vmatprep.subr.mxu0 0.0
        %387 = vmatpush2.msra.mxu0 0.0
        %388 = vmatprep.subr.mxu0 0.0
        %389 = vmatpush2.msra.mxu0 0.0
        %390 = vmatprep.subr.mxu0 0.0
        %391 = vmatpush2.msra.mxu0 0.0
        %392 = vmatprep.subr.mxu0 0.0
        %393 = vmatpush2.msra.mxu0 0.0
        %394 = vmatprep.subr.mxu0 0.0
        %395 = vmatpush2.msra.mxu0 0.0
        %396 = vmatprep.subr.mxu0 0.0
        %397 = vmatpush2.msra.mxu0 0.0
        %398 = vmatprep.subr.mxu0 0.0
        %399 = vmatpush2.msra.mxu0 0.0
        %400 = vmatprep.subr.mxu0 0.0
        %401 = vmatpush2.msra.mxu0 0.0
        %402 = vmatprep.subr.mxu0 0.0
        %403 = vmatpush2.msra.mxu0 0.0
        %404 = vmatprep.subr.mxu0 0.0
        %405 = vmatpush2.msra.mxu0 0.0
        %406 = vmatprep.subr.mxu0 0.0
        %407 = vmatpush2.msra.mxu0 0.0
        %408 = vmatprep.subr.mxu0 0.0
        %409 = vmatpush2.msra.mxu0 0.0
        %410 = vmatprep.subr.mxu0 0.0
        %411 = vmatpush2.msra.mxu0 0.0
        %412 = vmatprep.subr.mxu0 0.0
        %413 = vmatpush2.msra.mxu0 0.0
        %414 = vmatprep.subr.mxu0 0.0
        %415 = vmatpush2.msra.mxu0 0.0
        %416 = vmatprep.mubr.f32.mxu0 0.0
        %417 = vmatmul.mubr.f32.gmra.mxu0 %v300
        %v418 = vpop.f32.mrf.mxu0
        %v419 = vadd.f32 %v349, %v418
        %v420 = vpop.f32.mrf.mxu0
        %v421 = vadd.f32 %v350, %v420
        %422 = vdwg.mxu0
        %423 = vmatprep.subr.mxu0 0.0
        %424 = vmatpush1.msra.mxu0 %v348
        %425 = vmatprep.subr.mxu0 0.0
        %426 = vmatpush1.msra.mxu0 %v345
        %427 = vmatprep.subr.mxu0 0.0
        %428 = vmatpush1.msra.mxu0 %v342
        %429 = vmatprep.subr.mxu0 0.0
        %430 = vmatpush1.msra.mxu0 %v339
        %431 = vmatprep.subr.mxu0 0.0
        %432 = vmatpush1.msra.mxu0 %v336
        %433 = vmatprep.subr.mxu0 0.0
        %434 = vmatpush1.msra.mxu0 %v333
        %435 = vmatprep.subr.mxu0 0.0
        %436 = vmatpush1.msra.mxu0 %v330
        %437 = vmatprep.subr.mxu0 0.0
        %438 = vmatpush1.msra.mxu0 %v327
        %439 = vmatprep.subr.mxu0 0.0
        %440 = vmatpush1.msra.mxu0 %v324
        %441 = vmatprep.subr.mxu0 0.0
        %442 = vmatpush1.msra.mxu0 %v321
        %443 = vmatprep.subr.mxu0 0.0
        %444 = vmatpush1.msra.mxu0 %v318
        %445 = vmatprep.subr.mxu0 0.0
        %446 = vmatpush1.msra.mxu0 %v315
        %447 = vmatprep.subr.mxu0 0.0
        %448 = vmatpush1.msra.mxu0 %v312
        %449 = vmatprep.subr.mxu0 0.0
        %450 = vmatpush1.msra.mxu0 %v309
        %451 = vmatprep.subr.mxu0 0.0
        %452 = vmatpush1.msra.mxu0 %v306
        %453 = vmatprep.subr.mxu0 0.0
        %454 = vmatpush1.msra.mxu0 %v303
        %455 = vmatprep.subr.mxu0 0.0
        %456 = vmatpush2.msra.mxu0 0.0
        %457 = vmatprep.subr.mxu0 0.0
        %458 = vmatpush2.msra.mxu0 0.0
        %459 = vmatprep.subr.mxu0 0.0
        %460 = vmatpush2.msra.mxu0 0.0
        %461 = vmatprep.subr.mxu0 0.0
        %462 = vmatpush2.msra.mxu0 0.0
        %463 = vmatprep.subr.mxu0 0.0
        %464 = vmatpush2.msra.mxu0 0.0
        %465 = vmatprep.subr.mxu0 0.0
        %466 = vmatpush2.msra.mxu0 0.0
        %467 = vmatprep.subr.mxu0 0.0
        %468 = vmatpush2.msra.mxu0 0.0
        %469 = vmatprep.subr.mxu0 0.0
        %470 = vmatpush2.msra.mxu0 0.0
        %471 = vmatprep.subr.mxu0 0.0
        %472 = vmatpush2.msra.mxu0 0.0
        %473 = vmatprep.subr.mxu0 0.0
        %474 = vmatpush2.msra.mxu0 0.0
        %475 = vmatprep.subr.mxu0 0.0
        %476 = vmatpush2.msra.mxu0 0.0
        %477 = vmatprep.subr.mxu0 0.0
        %478 = vmatpush2.msra.mxu0 0.0
        %479 = vmatprep.subr.mxu0 0.0
        %480 = vmatpush2.msra.mxu0 0.0
        %481 = vmatprep.subr.mxu0 0.0
        %482 = vmatpush2.msra.mxu0 0.0
        %483 = vmatprep.subr.mxu0 0.0
        %484 = vmatpush2.msra.mxu0 0.0
        %485 = vmatprep.subr.mxu0 0.0
        %486 = vmatpush2.msra.mxu0 0.0
        %487 = vmatprep.mubr.f32.mxu0 0.0
        %488 = vmatmul.mubr.f32.gmra.mxu0 %v300
        %v489 = vpop.f32.mrf.mxu0
        %v490 = vadd.f32 %v351, %v489
        %v491 = vpop.f32.mrf.mxu0
        %492 = vdwg.mxu0
        %v493 = vld [vmem:[#allocation8] sm:$0xff]
        %v494 = vld [vmem:[#allocation8 + $0x8] sm:$0xff]
        %v495 = vld [vmem:[#allocation8 + $0x10] sm:$0xff]
        %v496 = vld [vmem:[#allocation8 + $0x18] sm:$0xff]
        %v497 = vld [vmem:[#allocation8 + $0x20] sm:$0xff]
        %v498 = vld [vmem:[#allocation8 + $0x28] sm:$0xff]
        %v499 = vld [vmem:[#allocation8 + $0x30] sm:$0xff]
        %v500 = vld [vmem:[#allocation8 + $0x38] sm:$0xff]
        %v501 = vld [vmem:[#allocation8 + $0x40] sm:$0xff]
        %v502 = vld [vmem:[#allocation8 + $0x48] sm:$0xff]
        %v503 = vld [vmem:[#allocation8 + $0x50] sm:$0xff]
        %v504 = vld [vmem:[#allocation8 + $0x58] sm:$0xff]
        %v505 = vld [vmem:[#allocation8 + $0x60] sm:$0xff]
        %v506 = vld [vmem:[#allocation8 + $0x68] sm:$0xff]
        %v507 = vld [vmem:[#allocation8 + $0x70] sm:$0xff]
        %v508 = vld [vmem:[#allocation8 + $0x78] sm:$0xff]
        %v509 = vld [vmem:[#allocation8 + $0x80] sm:$0xff]
        %v510 = vld [vmem:[#allocation8 + $0x88] sm:$0xff]
        %v511 = vld [vmem:[#allocation8 + $0x90] sm:$0xff]
        %v512 = vld [vmem:[#allocation8 + $0x98] sm:$0xff]
        %v513 = vld [vmem:[#allocation8 + $0xa0] sm:$0xff]
        %v514 = vld [vmem:[#allocation8 + $0xa8] sm:$0xff]
        %v515 = vld [vmem:[#allocation8 + $0xb0] sm:$0xff]
        %v516 = vld [vmem:[#allocation8 + $0xb8] sm:$0xff]
        %v517 = vld [vmem:[#allocation8 + $0xc0] sm:$0xff]
        %v518 = vld [vmem:[#allocation8 + $0xc8] sm:$0xff]
        %v519 = vld [vmem:[#allocation8 + $0xd0] sm:$0xff]
        %v520 = vld [vmem:[#allocation8 + $0xd8] sm:$0xff]
        %v521 = vld [vmem:[#allocation8 + $0xe0] sm:$0xff]
        %v522 = vld [vmem:[#allocation8 + $0xe8] sm:$0xff]
        %v523 = vld [vmem:[#allocation8 + $0xf0] sm:$0xff]
        %v524 = vld [vmem:[#allocation8 + $0xf8] sm:$0xff]
        %v525 = vld [vmem:[#allocation8 + $0x100] sm:$0xff]
        %v526 = vld [vmem:[#allocation8 + $0x108] sm:$0xff]
        %v527 = vld [vmem:[#allocation8 + $0x110] sm:$0xff]
        %v528 = vld [vmem:[#allocation8 + $0x118] sm:$0xff]
        %v529 = vld [vmem:[#allocation8 + $0x120] sm:$0xff]
        %v530 = vld [vmem:[#allocation8 + $0x128] sm:$0xff]
        %v531 = vld [vmem:[#allocation8 + $0x130] sm:$0xff]
        %v532 = vld [vmem:[#allocation8 + $0x138] sm:$0xff]
        %v533 = vld [vmem:[#allocation8 + $0x140] sm:$0xff]
        %v534 = vld [vmem:[#allocation8 + $0x148] sm:$0xff]
        %v535 = vld [vmem:[#allocation8 + $0x150] sm:$0xff]
        %v536 = vld [vmem:[#allocation8 + $0x158] sm:$0xff]
        %v537 = vld [vmem:[#allocation8 + $0x160] sm:$0xff]
        %v538 = vld [vmem:[#allocation8 + $0x168] sm:$0xff]
        %v539 = vld [vmem:[#allocation8 + $0x170] sm:$0xff]
        %v540 = vld [vmem:[#allocation8 + $0x178] sm:$0xff]
        %541 = vmatprep.subr.mxu0 %v539
        %542 = vmatpush1.msra.mxu0 %v538
        %543 = vmatprep.subr.mxu0 %v536
        %544 = vmatpush1.msra.mxu0 %v535
        %545 = vmatprep.subr.mxu0 %v533
        %546 = vmatpush1.msra.mxu0 %v532
        %547 = vmatprep.subr.mxu0 %v530
        %548 = vmatpush1.msra.mxu0 %v529
        %549 = vmatprep.subr.mxu0 %v527
        %550 = vmatpush1.msra.mxu0 %v526
        %551 = vmatprep.subr.mxu0 %v524
        %552 = vmatpush1.msra.mxu0 %v523
        %553 = vmatprep.subr.mxu0 %v521
        %554 = vmatpush1.msra.mxu0 %v520
        %555 = vmatprep.subr.mxu0 %v518
        %556 = vmatpush1.msra.mxu0 %v517
        %557 = vmatprep.subr.mxu0 %v515
        %558 = vmatpush1.msra.mxu0 %v514
        %559 = vmatprep.subr.mxu0 %v512
        %560 = vmatpush1.msra.mxu0 %v511
        %561 = vmatprep.subr.mxu0 %v509
        %562 = vmatpush1.msra.mxu0 %v508
        %563 = vmatprep.subr.mxu0 %v506
        %564 = vmatpush1.msra.mxu0 %v505
        %565 = vmatprep.subr.mxu0 %v503
        %566 = vmatpush1.msra.mxu0 %v502
        %567 = vmatprep.subr.mxu0 %v500
        %568 = vmatpush1.msra.mxu0 %v499
        %569 = vmatprep.subr.mxu0 %v497
        %570 = vmatpush1.msra.mxu0 %v496
        %571 = vmatprep.subr.mxu0 %v494
        %572 = vmatpush1.msra.mxu0 %v493
        %573 = vmatprep.subr.mxu0 0.0
        %574 = vmatpush2.msra.mxu0 0.0
        %575 = vmatprep.subr.mxu0 0.0
        %576 = vmatpush2.msra.mxu0 0.0
        %577 = vmatprep.subr.mxu0 0.0
        %578 = vmatpush2.msra.mxu0 0.0
        %579 = vmatprep.subr.mxu0 0.0
        %580 = vmatpush2.msra.mxu0 0.0
        %581 = vmatprep.subr.mxu0 0.0
        %582 = vmatpush2.msra.mxu0 0.0
        %583 = vmatprep.subr.mxu0 0.0
        %584 = vmatpush2.msra.mxu0 0.0
        %585 = vmatprep.subr.mxu0 0.0
        %586 = vmatpush2.msra.mxu0 0.0
        %587 = vmatprep.subr.mxu0 0.0
        %588 = vmatpush2.msra.mxu0 0.0
        %589 = vmatprep.subr.mxu0 0.0
        %590 = vmatpush2.msra.mxu0 0.0
        %591 = vmatprep.subr.mxu0 0.0
        %592 = vmatpush2.msra.mxu0 0.0
        %593 = vmatprep.subr.mxu0 0.0
        %594 = vmatpush2.msra.mxu0 0.0
        %595 = vmatprep.subr.mxu0 0.0
        %596 = vmatpush2.msra.mxu0 0.0
        %597 = vmatprep.subr.mxu0 0.0
        %598 = vmatpush2.msra.mxu0 0.0
        %599 = vmatprep.subr.mxu0 0.0
        %600 = vmatpush2.msra.mxu0 0.0
        %601 = vmatprep.subr.mxu0 0.0
        %602 = vmatpush2.msra.mxu0 0.0
        %603 = vmatprep.subr.mxu0 0.0
        %604 = vmatpush2.msra.mxu0 0.0
        %605 = vmatprep.mubr.f32.mxu0 0.0
        %606 = vmatmul.mubr.f32.gmra.mxu0 %v299
        %v607 = vpop.f32.mrf.mxu0
        %v608 = vadd.f32 0.0, %v607
        %v609 = vpop.f32.mrf.mxu0
        %v610 = vadd.f32 0.0, %v609
        %611 = vdwg.mxu0
        %612 = vmatprep.subr.mxu0 0.0
        %613 = vmatpush1.msra.mxu0 %v540
        %614 = vmatprep.subr.mxu0 0.0
        %615 = vmatpush1.msra.mxu0 %v537
        %616 = vmatprep.subr.mxu0 0.0
        %617 = vmatpush1.msra.mxu0 %v534
        %618 = vmatprep.subr.mxu0 0.0
        %619 = vmatpush1.msra.mxu0 %v531
        %620 = vmatprep.subr.mxu0 0.0
        %621 = vmatpush1.msra.mxu0 %v528
        %622 = vmatprep.subr.mxu0 0.0
        %623 = vmatpush1.msra.mxu0 %v525
        %624 = vmatprep.subr.mxu0 0.0
        %625 = vmatpush1.msra.mxu0 %v522
        %626 = vmatprep.subr.mxu0 0.0
        %627 = vmatpush1.msra.mxu0 %v519
        %628 = vmatprep.subr.mxu0 0.0
        %629 = vmatpush1.msra.mxu0 %v516
        %630 = vmatprep.subr.mxu0 0.0
        %631 = vmatpush1.msra.mxu0 %v513
        %632 = vmatprep.subr.mxu0 0.0
        %633 = vmatpush1.msra.mxu0 %v510
        %634 = vmatprep.subr.mxu0 0.0
        %635 = vmatpush1.msra.mxu0 %v507
        %636 = vmatprep.subr.mxu0 0.0
        %637 = vmatpush1.msra.mxu0 %v504
        %638 = vmatprep.subr.mxu0 0.0
        %639 = vmatpush1.msra.mxu0 %v501
        %640 = vmatprep.subr.mxu0 0.0
        %641 = vmatpush1.msra.mxu0 %v498
        %642 = vmatprep.subr.mxu0 0.0
        %643 = vmatpush1.msra.mxu0 %v495
        %644 = vmatprep.subr.mxu0 0.0
        %645 = vmatpush2.msra.mxu0 0.0
        %646 = vmatprep.subr.mxu0 0.0
        %647 = vmatpush2.msra.mxu0 0.0
        %648 = vmatprep.subr.mxu0 0.0
        %649 = vmatpush2.msra.mxu0 0.0
        %650 = vmatprep.subr.mxu0 0.0
        %651 = vmatpush2.msra.mxu0 0.0
        %652 = vmatprep.subr.mxu0 0.0
        %653 = vmatpush2.msra.mxu0 0.0
        %654 = vmatprep.subr.mxu0 0.0
        %655 = vmatpush2.msra.mxu0 0.0
        %656 = vmatprep.subr.mxu0 0.0
        %657 = vmatpush2.msra.mxu0 0.0
        %658 = vmatprep.subr.mxu0 0.0
        %659 = vmatpush2.msra.mxu0 0.0
        %660 = vmatprep.subr.mxu0 0.0
        %661 = vmatpush2.msra.mxu0 0.0
        %662 = vmatprep.subr.mxu0 0.0
        %663 = vmatpush2.msra.mxu0 0.0
        %664 = vmatprep.subr.mxu0 0.0
        %665 = vmatpush2.msra.mxu0 0.0
        %666 = vmatprep.subr.mxu0 0.0
        %667 = vmatpush2.msra.mxu0 0.0
        %668 = vmatprep.subr.mxu0 0.0
        %669 = vmatpush2.msra.mxu0 0.0
        %670 = vmatprep.subr.mxu0 0.0
        %671 = vmatpush2.msra.mxu0 0.0
        %672 = vmatprep.subr.mxu0 0.0
        %673 = vmatpush2.msra.mxu0 0.0
        %674 = vmatprep.subr.mxu0 0.0
        %675 = vmatpush2.msra.mxu0 0.0
        %676 = vmatprep.mubr.f32.mxu0 0.0
        %677 = vmatmul.mubr.f32.gmra.mxu0 %v299
        %v678 = vpop.f32.mrf.mxu0
        %v679 = vadd.f32 0.0, %v678
        %v680 = vpop.f32.mrf.mxu0
        %681 = vdwg.mxu0
        %v682 = vadd.f32 %v419, %v608
        %v683 = vxor.u32 %v682, 2147483648
        %v684 = vmul.f32 %v683, 1.442695
        %v685 = vpow.pop %v684
        %v686 = vadd.f32 %v685, 1.0
        %v687 = vrcp.pop %v686
        %v688 = vmul.f32 1.0, %v687
        %v689 = vadd.f32 %v421, %v610
        %v690 = vxor.u32 %v689, 2147483648
        %v691 = vmul.f32 %v690, 1.442695
        %v692 = vpow.pop %v691
        %v693 = vadd.f32 %v692, 1.0
        %v694 = vrcp.pop %v693
        %v695 = vmul.f32 1.0, %v694
        %v696 = vld [vmem:[#allocation11] sm:$0xff]
        %v697 = vadd.f32 %v679, %v696
        %v698 = vmul.f32 %v688, %v697
        %v699 = vadd.f32 %v490, %v698
        %v700 = vtanh.pop %v699
        %v701 = vsub.f32 1.0, %v695
        %v702 = vmul.f32 %v701, %v700
        %v703 = vmul.f32 %v695, %v299
        %v704 = vadd.f32 %v702, %v703
        %705 = vst [vmem:[%s293] sm:$0xff] %v704
        %706 = vst [vmem:[#allocation2] sm:$0xff] %v704
        %s707 = sand.u32 %s142, 1
        %s708 = scalar_lea.sflag [#allocation5], %s707
        %s709 = sand.u32 %s142, 1
        %s710 = smul.addr %s709, 8
        %s711 = scalar_lea.vmem [#allocation12], %s710
        // Predicated region
        $region65: #{tpu_custom_call.1} parent=39 // pred_check
          %p712 = pneg %p152
        $region66: #{tpu_custom_call.1} parent=39 // pred_check_branch
          %714 = sbr.rel (%p712) target = $region68
        $region67: #{tpu_custom_call.1} parent=39 // pred_region
          %s716 = ssub.s32 128, 128
          %717 = vsyncadd %s708, %s716
          %s718 = smul.addr %s24, 128
          %s719 = scalar_lea.hbm %s5, %s718
          %s721 = sshll.u32 %s711, 4
          %s722 = int_to_ptr.vmem [resolvable:$true] %s721
          %724 = dma.vmem_to_hbm [thread:$0]  %s722, 128, %s719, %s708
        $region68: #{tpu_custom_call.1} parent=39 // pred_fallthru
          _
      $region40: #{tpu_custom_call.1} parent=5 // pred_fallthru
        _
      %p725 = scmp.le.s32.totalorder 2, %s19
      // Predicated region
      $region69: #{tpu_custom_call.1} parent=5 // pred_check
        %p726 = pneg %p725
      $region70: #{tpu_custom_call.1} parent=5 // pred_check_branch
        %728 = sbr.rel (%p726) target = $region72
      $region71: #{tpu_custom_call.1} parent=5 // pred_region
        %s729 = ssub.s32 %s19, 2
        // Predicated region
        $region73: #{tpu_custom_call.1} parent=71 // pred_check
          %p730 = pneg %p158
        $region74: #{tpu_custom_call.1} parent=71 // pred_check_branch
          %732 = sbr.rel (%p730) target = $region76
        $region75: #{tpu_custom_call.1} parent=71 // pred_region
          %s733 = sand.u32 %s143, 1
          %s734 = scalar_lea.sflag [#allocation5], %s733
          %s735 = sand.u32 %s143, 1
          %s736 = smul.addr %s735, 8
          %s737 = scalar_lea.vmem [#allocation12], %s736
          %738 = dma.done %s734, 128
        $region76: #{tpu_custom_call.1} parent=71 // pred_fallthru
          _
      $region72: #{tpu_custom_call.1} parent=5 // pred_fallthru
        _
    $region6: #{tpu_custom_call.1} parent=1 // loop_footer
      %s23 = sadd.s32 1, %s19
    $region7: #{tpu_custom_call.1} parent=1 // loop_footer_branch
      %18 = sbr.rel target = $region3
    $region8: #{tpu_custom_call.1} parent=1 // loop_exit
      _
    %739 = vsyncpa [#allocation4], 1
    %s740 = scalar_lea.sflag [#allocation4], 1
    %741 = vsyncpa %s740, 1
    %742 = vsyncpa [#allocation7], 1
    %743 = vsyncpa [#allocation10], 1
    %744 = vsyncpa [#allocation5], 1
    %s745 = scalar_lea.sflag [#allocation5], 1
    %746 = vsyncpa %s745, 1

</llo_original>
